<compile_context>
chip_gen: v6e
topology: v6e:2x2x1
jax: 0.10.0
libtpu: 0.0.40
codegen_flags: <defaults>
</compile_context>

<pallas_src>
import functools

import jax
import jax.numpy as jnp
from jax.experimental import pallas as pl
from jax.experimental.pallas import tpu as pltpu


def _clip_encode_kernel(patches_ref, pool_ref, wp_ref, params_ref, wproj_ref,
                        out_ref):
    # patches_ref: (TB*Np, Pd_pad) bf16   flattened (lane-padded) patches
    # pool_ref:    (TB, TB*Np)     bf16   block-diagonal 1/Np pooling matrix
    # wp_ref:      (Pd_pad, D)     bf16   patch-embedding weight (resident)
    # params_ref:  (3, D)          f32    rows = [bias, gamma, beta]
    # wproj_ref:   (D, E_pad)      bf16   final visual projection (resident)
    # out_ref:     (TB, E_pad)     f32    embeddings (`.float()` semantics)

    # 1) per-image mean of patch vectors, folded into the MXU.  Pool-before-
    #    embed exploits linearity (mean(x) @ W == mean(x @ W)) and cuts the
    #    patch-embed MACs by ~Np.  bf16 x bf16, f32 accumulation.
    pooled_patches = jnp.dot(pool_ref[...], patches_ref[...],
                             preferred_element_type=jnp.float32)   # (TB, Pd_pad)

    # 2) patch embedding of the pooled patches: one small native MXU pass.
    pooled = jnp.dot(pooled_patches.astype(jnp.bfloat16), wp_ref[...],
                     preferred_element_type=jnp.float32)           # (TB, D)

    params = params_ref[...]                                       # (3, D) f32
    bias, gamma, beta = params[0:1, :], params[1:2, :], params[2:3, :]
    pooled = pooled + bias                                         # mean(x)+b == mean(x+b)

    # 3) LayerNorm over the feature dim (all f32 VPU math; v5e-safe).
    mu = jnp.mean(pooled, axis=-1, keepdims=True)
    diff = pooled - mu
    var = jnp.mean(diff * diff, axis=-1, keepdims=True)
    ln = diff * jax.lax.rsqrt(var + 1e-5)
    ln = ln * gamma + beta                                         # (TB, D)

    # 4) batched final projection: bf16 x bf16 MXU matmul, f32 accumulation.
    emb = jnp.dot(ln.astype(jnp.bfloat16), wproj_ref[...],
                  preferred_element_type=jnp.float32)              # (TB, E_pad)

    # 5) `.float()` cast -- emb is already f32; E_pad is a multiple of 128 so
    #    this is a full-lane, unmasked store.
    out_ref[...] = emb


def _round_up(n, m):
    return ((n + m - 1) // m) * m


def _default_tb(batch):
    # v7x has 2 TensorCores per chip -> keep an even parallel grid of 2 steps.
    # v5e / v6e have a single TC -> grid=(1,) avoids per-step fixed overhead.
    try:
        kind = jax.devices()[0].device_kind.lower()
    except Exception:  # pragma: no cover - defensive; default to single step.
        kind = ""
    if "v7" in kind and batch >= 2:
        return max(1, batch // 2)
    return batch


@functools.partial(jax.jit, static_argnames=("patch", "tb"))
def clip_model_wrapper_forward(x, w_patch, b_patch, gamma, beta, w_proj, *,
                               patch, tb=None):
    """x: (B, C, H, W) NCHW like the PyTorch module.  Returns (B, E) float32."""
    B, C, H, W = x.shape
    P = patch
    nh, nw = H // P, W // P
    Np = nh * nw
    Pd = C * P * P
    D = w_patch.shape[1]
    E = w_proj.shape[1]

    # Per-generation batch tiling (see _default_tb).
    if tb is None:
        tb = _default_tb(B)
    TB = min(tb, B)
    n_tiles = pl.cdiv(B, TB)
    B_pad = n_tiles * TB

    # Lane alignment: pad the contraction dim (Pd) and the output dim (E) up to
    # multiples of 128 so all loads / the output store are unmasked full-lane
    # ops.  Zero padding contributes nothing to the matmuls.
    Pd_pad = _round_up(Pd, 128)
    E_pad = _round_up(E, 128)

    # Patchify (glue): (B,C,H,W) -> (B, Np, C*P*P), channel-major within patch,
    # matching a Conv2d(C, D, P, stride=P) weight flattened to (C*P*P, D).
    # TODO(synk): fuse this transpose into the kernel at real image sizes.
    patches = x.reshape(B, C, nh, P, nw, P)
    patches = patches.transpose(0, 2, 4, 1, 3, 5).reshape(B, Np, Pd)
    patches = patches.astype(jnp.bfloat16)
    patches = jnp.pad(patches, ((0, B_pad - B), (0, 0), (0, Pd_pad - Pd)))
    patches = patches.reshape(B_pad * Np, Pd_pad)

    # Lane-padded bf16 weights (hoisted casts; resident -> DMA'd once).
    w_patch_p = jnp.pad(w_patch.astype(jnp.bfloat16), ((0, Pd_pad - Pd), (0, 0)))
    w_proj_p = jnp.pad(w_proj.astype(jnp.bfloat16), ((0, 0), (0, E_pad - E)))

    # Block-diagonal mean-pool matrix in bf16 (1/Np = 0.25 here, exact in bf16).
    pool = (jnp.arange(TB)[:, None] == (jnp.arange(TB * Np)[None, :] // Np))
    pool = (pool.astype(jnp.float32) / float(Np)).astype(jnp.bfloat16)

    # Pack bias / gamma / beta into one resident (3, D) f32 tile (LN is f32 VPU).
    params = jnp.concatenate([b_patch.astype(jnp.float32),
                              gamma.astype(jnp.float32),
                              beta.astype(jnp.float32)], axis=0)

    grid_spec = pltpu.PrefetchScalarGridSpec(
        num_scalar_prefetch=0,
        grid=(n_tiles,),
        in_specs=[
            pl.BlockSpec((TB * Np, Pd_pad), lambda t: (t, 0)),  # TB images' patches
            pl.BlockSpec((TB, TB * Np), lambda t: (0, 0)),      # resident pool matrix
            pl.BlockSpec((Pd_pad, D), lambda t: (0, 0)),        # resident patch weight
            pl.BlockSpec((3, D), lambda t: (0, 0)),             # resident packed params
            pl.BlockSpec((D, E_pad), lambda t: (0, 0)),         # resident projection
        ],
        out_specs=pl.BlockSpec((TB, E_pad), lambda t: (t, 0)),
    )

    out = pl.pallas_call(
        _clip_encode_kernel,
        out_shape=jax.ShapeDtypeStruct((B_pad, E_pad), jnp.float32),
        grid_spec=grid_spec,
        compiler_params=pltpu.CompilerParams(
            dimension_semantics=("parallel",)),
    )(patches, pool, w_patch_p, params, w_proj_p)

    return out[:B, :E]


if __name__ == "__main__":
    # Small, deterministic shapes consistent with an image-encoder forward.
    B, C, H, W = 16, 3, 16, 16    # NCHW input, like PyTorch
    P = 8                         # patch size -> Np = 4 patches per image
    D = 32                        # encoder hidden width
    E = 16                        # CLIP embedding dim

    key = jax.random.PRNGKey(0)
    k_x, k_wp, k_bp, k_g, k_b, k_proj = jax.random.split(key, 6)

    x = jax.random.normal(k_x, (B, C, H, W), dtype=jnp.float32)

    # Deterministic synthetic "model" parameters (stand-in for fp16 CLIP weights).
    w_patch = (jax.random.normal(k_wp, (C * P * P, D), jnp.float32) * 0.02
               ).astype(jnp.bfloat16)
    b_patch = (jax.random.normal(k_bp, (1, D), jnp.float32) * 0.02
               ).astype(jnp.bfloat16)
    gamma = jnp.ones((1, D), jnp.bfloat16)
    beta = jnp.zeros((1, D), jnp.bfloat16)
    w_proj = (jax.random.normal(k_proj, (D, E), jnp.float32) * 0.02
              ).astype(jnp.bfloat16)

    emb = clip_model_wrapper_forward(x, w_patch, b_patch, gamma, beta, w_proj,
                                     patch=P)
    emb = jax.block_until_ready(emb)

    assert emb.shape == (B, E), emb.shape
    assert emb.dtype == jnp.float32, emb.dtype   # `.float()` semantics

    # Plain-JAX reference of the same math (generous tolerance for bf16 MXU and
    # the pool-before-embed accumulation-order change).
    patches_ref = x.reshape(B, C, H // P, P, W // P, P)
    patches_ref = patches_ref.transpose(0, 2, 4, 1, 3, 5).reshape(B, -1, C * P * P)
    tokens_ref = jnp.einsum("bnp,pd->bnd", patches_ref.astype(jnp.bfloat16),
                            w_patch, preferred_element_type=jnp.float32)
    pooled_ref = tokens_ref.mean(axis=1) + b_patch.astype(jnp.float32)
    mu_r = pooled_ref.mean(-1, keepdims=True)
    var_r = ((pooled_ref - mu_r) ** 2).mean(-1, keepdims=True)
    ln_r = (pooled_ref - mu_r) * jax.lax.rsqrt(var_r + 1e-5)
    ln_r = ln_r * gamma.astype(jnp.float32) + beta.astype(jnp.float32)
    ref = ln_r @ w_proj.astype(jnp.float32)
    assert jnp.allclose(emb, ref, atol=5e-2, rtol=5e-2), \
        float(jnp.abs(emb - ref).max())

    print("KERNEL_OK")
</pallas_src>

<mosaic_0001>
module attributes {stable_mosaic.version = 11 : i64} {
  func.func @_clip_encode_kernel(%arg0: i32, %arg1: memref<64x256xbf16, #tpu.memory_space<vmem>>, %arg2: memref<16x64xbf16, #tpu.memory_space<vmem>>, %arg3: memref<256x32xbf16, #tpu.memory_space<vmem>>, %arg4: memref<3x32xf32, #tpu.memory_space<vmem>>, %arg5: memref<32x128xbf16, #tpu.memory_space<vmem>>, %arg6: memref<16x128xf32, #tpu.memory_space<vmem>>) attributes {dimension_semantics = [#tpu.dimension_semantics<parallel>], iteration_bounds = array<i64: 1>, scalar_prefetch = 0 : i64, scratch_operands = 0 : i64, tpu.core_type = #tpu.core_type<tc>, window_params = [{transform_indices = @transform_0, window_bounds = array<i64: 64, 256>}, {pipeline_mode = #tpu.pipeline_mode<synchronous>, transform_indices = @transform_1, window_bounds = array<i64: 16, 64>}, {pipeline_mode = #tpu.pipeline_mode<synchronous>, transform_indices = @transform_2, window_bounds = array<i64: 256, 32>}, {pipeline_mode = #tpu.pipeline_mode<synchronous>, transform_indices = @transform_3, window_bounds = array<i64: 3, 32>}, {pipeline_mode = #tpu.pipeline_mode<synchronous>, transform_indices = @transform_4, window_bounds = array<i64: 32, 128>}, {transform_indices = @transform_5, window_bounds = array<i64: 16, 128>}]} {
    %c0 = arith.constant 0 : index
    %c0_0 = arith.constant 0 : index
    %0 = vector.load %arg2[%c0, %c0_0] : memref<16x64xbf16, #tpu.memory_space<vmem>>, vector<16x64xbf16>
    %c0_1 = arith.constant 0 : index
    %c0_2 = arith.constant 0 : index
    %1 = vector.load %arg1[%c0_1, %c0_2] : memref<64x256xbf16, #tpu.memory_space<vmem>>, vector<64x256xbf16>
    %cst = arith.constant dense<0.000000e+00> : vector<16x256xf32>
    %2 = tpu.matmul %0, %1, %cst {dimension_numbers = #tpu.dot_dimension_numbers<[1], [0], [0], [1], [0, 0, 1, 1], [], []>} : vector<16x64xbf16>, vector<64x256xbf16>, vector<16x256xf32> -> vector<16x256xf32>
    %3 = arith.truncf %2 : vector<16x256xf32> to vector<16x256xbf16>
    %c0_3 = arith.constant 0 : index
    %c0_4 = arith.constant 0 : index
    %4 = vector.load %arg3[%c0_3, %c0_4] : memref<256x32xbf16, #tpu.memory_space<vmem>>, vector<256x32xbf16>
    %cst_5 = arith.constant dense<0.000000e+00> : vector<16x32xf32>
    %5 = tpu.matmul %3, %4, %cst_5 {dimension_numbers = #tpu.dot_dimension_numbers<[1], [0], [0], [1], [0, 0, 1, 1], [], []>} : vector<16x256xbf16>, vector<256x32xbf16>, vector<16x32xf32> -> vector<16x32xf32>
    %c0_6 = arith.constant 0 : index
    %c0_7 = arith.constant 0 : index
    %6 = vector.load %arg4[%c0_6, %c0_7] : memref<3x32xf32, #tpu.memory_space<vmem>>, vector<3x32xf32>
    %7 = vector.extract_strided_slice %6 {offsets = [0, 0], sizes = [1, 32], strides = [1, 1]} : vector<3x32xf32> to vector<1x32xf32>
    %8 = vector.extract_strided_slice %6 {offsets = [1, 0], sizes = [1, 32], strides = [1, 1]} : vector<3x32xf32> to vector<1x32xf32>
    %9 = vector.extract_strided_slice %6 {offsets = [2, 0], sizes = [1, 32], strides = [1, 1]} : vector<3x32xf32> to vector<1x32xf32>
    %10 = vector.broadcast %7 : vector<1x32xf32> to vector<16x32xf32>
    %11 = arith.addf %5, %10 : vector<16x32xf32>
    %cst_8 = arith.constant dense<0.000000e+00> : vector<16xf32>
    %12 = vector.multi_reduction <add>, %11, %cst_8 [1] : vector<16x32xf32> to vector<16xf32>
    %13 = vector.shape_cast %12 : vector<16xf32> to vector<16x1xf32>
    %cst_9 = arith.constant 3.200000e+01 : f32
    %14 = vector.broadcast %cst_9 : f32 to vector<16x1xf32>
    %15 = arith.divf %13, %14 : vector<16x1xf32>
    %16 = vector.broadcast %15 : vector<16x1xf32> to vector<16x32xf32>
    %17 = arith.subf %11, %16 : vector<16x32xf32>
    %18 = arith.mulf %17, %17 : vector<16x32xf32>
    %cst_10 = arith.constant dense<0.000000e+00> : vector<16xf32>
    %19 = vector.multi_reduction <add>, %18, %cst_10 [1] : vector<16x32xf32> to vector<16xf32>
    %20 = vector.shape_cast %19 : vector<16xf32> to vector<16x1xf32>
    %cst_11 = arith.constant 3.200000e+01 : f32
    %21 = vector.broadcast %cst_11 : f32 to vector<16x1xf32>
    %22 = arith.divf %20, %21 : vector<16x1xf32>
    %cst_12 = arith.constant 9.99999974E-6 : f32
    %23 = vector.broadcast %cst_12 : f32 to vector<16x1xf32>
    %24 = arith.addf %22, %23 : vector<16x1xf32>
    %25 = math.rsqrt %24 : vector<16x1xf32>
    %26 = vector.broadcast %25 : vector<16x1xf32> to vector<16x32xf32>
    %27 = arith.mulf %17, %26 : vector<16x32xf32>
    %28 = vector.broadcast %8 : vector<1x32xf32> to vector<16x32xf32>
    %29 = arith.mulf %27, %28 : vector<16x32xf32>
    %30 = vector.broadcast %9 : vector<1x32xf32> to vector<16x32xf32>
    %31 = arith.addf %29, %30 : vector<16x32xf32>
    %32 = arith.truncf %31 : vector<16x32xf32> to vector<16x32xbf16>
    %c0_13 = arith.constant 0 : index
    %c0_14 = arith.constant 0 : index
    %33 = vector.load %arg5[%c0_13, %c0_14] : memref<32x128xbf16, #tpu.memory_space<vmem>>, vector<32x128xbf16>
    %cst_15 = arith.constant dense<0.000000e+00> : vector<16x128xf32>
    %34 = tpu.matmul %32, %33, %cst_15 {dimension_numbers = #tpu.dot_dimension_numbers<[1], [0], [0], [1], [0, 0, 1, 1], [], []>} : vector<16x32xbf16>, vector<32x128xbf16>, vector<16x128xf32> -> vector<16x128xf32>
    %c0_16 = arith.constant 0 : index
    %c0_17 = arith.constant 0 : index
    %35 = vector.load %arg6[%c0_16, %c0_17] : memref<16x128xf32, #tpu.memory_space<vmem>>, vector<16x128xf32>
    tpu.vector_store %arg6[%c0_16, %c0_17], %34 {strides = array<i32>} : memref<16x128xf32, #tpu.memory_space<vmem>>, vector<16x128xf32>,
    return
  }
  func.func @transform_0(%arg0: i32) -> (i32, i32) {
    %c0_i32 = arith.constant 0 : i32
    %c0_i32_0 = arith.constant 0 : i32
    return %arg0, %c0_i32 : i32, i32
  }
  func.func @transform_1(%arg0: i32) -> (i32, i32) {
    %c0_i32 = arith.constant 0 : i32
    %c0_i32_0 = arith.constant 0 : i32
    %c0_i32_1 = arith.constant 0 : i32
    return %c0_i32, %c0_i32_0 : i32, i32
  }
  func.func @transform_2(%arg0: i32) -> (i32, i32) {
    %c0_i32 = arith.constant 0 : i32
    %c0_i32_0 = arith.constant 0 : i32
    %c0_i32_1 = arith.constant 0 : i32
    return %c0_i32, %c0_i32_0 : i32, i32
  }
  func.func @transform_3(%arg0: i32) -> (i32, i32) {
    %c0_i32 = arith.constant 0 : i32
    %c0_i32_0 = arith.constant 0 : i32
    %c0_i32_1 = arith.constant 0 : i32
    return %c0_i32, %c0_i32_0 : i32, i32
  }
  func.func @transform_4(%arg0: i32) -> (i32, i32) {
    %c0_i32 = arith.constant 0 : i32
    %c0_i32_0 = arith.constant 0 : i32
    %c0_i32_1 = arith.constant 0 : i32
    return %c0_i32, %c0_i32_0 : i32, i32
  }
  func.func @transform_5(%arg0: i32) -> (i32, i32) {
    %c0_i32 = arith.constant 0 : i32
    %c0_i32_0 = arith.constant 0 : i32
    return %arg0, %c0_i32 : i32, i32
  }
}

</mosaic_0001>

<llo_original>
// kernel: clip_model_wrapper_forward.1
$region0: #{clip_model_wrapper_forward.1}
  #allocation0 [shape = 'u32[]', space=smem, size = 0x4, offset = 0x4, fixed_abs, tag = 'smem constant byte address 0x4 - core index']
  #allocation1 [shape = 'u32[144,128]{1,0:T(1,128)}', space=vmem, size = 0x12000, scoped, tag = 'internal scratch']
  %s0 = inlined_call_operand.vmem [shape: bf16[64,256], index: 0, kind: input, shape index: {}]
  %s1 = inlined_call_operand.vmem [shape: bf16[16,64], index: 1, kind: input, shape index: {}]
  %s2 = inlined_call_operand.vmem [shape: bf16[256,32], index: 2, kind: input, shape index: {}]
  %s3 = inlined_call_operand.vmem [shape: f32[3,32], index: 3, kind: input, shape index: {}]
  %s4 = inlined_call_operand.vmem [shape: bf16[32,128], index: 4, kind: input, shape index: {}]
  %s5 = inlined_call_operand.hbm [shape: f32[16,128], index: 5, kind: output, shape index: {}]
  %s6 = sld [smem:[#allocation0]]
  $region30: #{clip_model_wrapper_forward.1} parent=0
    _
  %s8 = ssub.s32 1, %s6
  %s9 = scalar_select 0, %s8, %s6
  $region1: #{clip_model_wrapper_forward.1} parent=0
    #allocation2 [shape = 'u8[8192]{0}', space=vmem, size = 0x2000, scoped, tag = 'output window, operand 0, single buffered']
    #allocation3 [shape = 's32[1]{0}', space=sflag, size = 0x4, scoped, tag = 'scoped memory for clip_model_wrapper_forward.1']
    %10 = vsyncpa [#allocation3], 0
    // Predicated region
    $region2: #{clip_model_wrapper_forward.1} parent=1 // pred_check
      _
    $region3: #{clip_model_wrapper_forward.1} parent=1 // pred_check_branch
      %12 = sbr.rel (0) target = $region5
    $region4: #{clip_model_wrapper_forward.1} parent=1 // pred_region
      _
    $region5: #{clip_model_wrapper_forward.1} parent=1 // pred_fallthru
      _
    // Predicated region
    $region6: #{clip_model_wrapper_forward.1} parent=1 // pred_check
      _
    $region7: #{clip_model_wrapper_forward.1} parent=1 // pred_check_branch
      %14 = sbr.rel (0) target = $region9
    $region8: #{clip_model_wrapper_forward.1} parent=1 // pred_region
      _
    $region9: #{clip_model_wrapper_forward.1} parent=1 // pred_fallthru
      _
    // Predicated region
    $region10: #{clip_model_wrapper_forward.1} parent=1 // pred_check
      _
    $region11: #{clip_model_wrapper_forward.1} parent=1 // pred_check_branch
      %16 = sbr.rel (0) target = $region13
    $region12: #{clip_model_wrapper_forward.1} parent=1 // pred_region
      _
    $region13: #{clip_model_wrapper_forward.1} parent=1 // pred_fallthru
      _
    // Predicated region
    $region14: #{clip_model_wrapper_forward.1} parent=1 // pred_check
      _
    $region15: #{clip_model_wrapper_forward.1} parent=1 // pred_check_branch
      %18 = sbr.rel (0) target = $region17
    $region16: #{clip_model_wrapper_forward.1} parent=1 // pred_region
      _
    $region17: #{clip_model_wrapper_forward.1} parent=1 // pred_fallthru
      _
    // Predicated region
    $region18: #{clip_model_wrapper_forward.1} parent=1 // pred_check
      _
    $region19: #{clip_model_wrapper_forward.1} parent=1 // pred_check_branch
      %20 = sbr.rel (0) target = $region21
    $region20: #{clip_model_wrapper_forward.1} parent=1 // pred_region
      _
    $region21: #{clip_model_wrapper_forward.1} parent=1 // pred_fallthru
      _
    %v22 = vld [vmem:[%s1] sm:$0xf]
    %v23 = vld [vmem:[%s1 + $0x4] sm:$0xf]
    %v24 = vld [vmem:[%s0] sm:$0xff]
    %v25 = vld [vmem:[%s0 + $0x8] sm:$0xff]
    %v26 = vld [vmem:[%s0 + $0x10] sm:$0xff]
    %v27 = vld [vmem:[%s0 + $0x18] sm:$0xff]
    %v28 = vld [vmem:[%s0 + $0x20] sm:$0xff]
    %v29 = vld [vmem:[%s0 + $0x28] sm:$0xff]
    %v30 = vld [vmem:[%s0 + $0x30] sm:$0xff]
    %v31 = vld [vmem:[%s0 + $0x38] sm:$0xff]
    %v34 = vunpack.c.l.b16 %v22
    %v35 = vunpack.c.l.b16 %v23
    %v36 = vpack.c.b16 %v35, %v34
    %v45 = vunpack.c.l.b16 %v24
    %v46 = vunpack.c.h.b16 %v24
    %v47 = vunpack.c.l.b16 %v25
    %v48 = vunpack.c.h.b16 %v25
    %v49 = vunpack.c.l.b16 %v26
    %v50 = vunpack.c.h.b16 %v26
    %v51 = vunpack.c.l.b16 %v27
    %v52 = vunpack.c.h.b16 %v27
    %v53 = vunpack.c.l.b16 %v28
    %v54 = vunpack.c.h.b16 %v28
    %v55 = vunpack.c.l.b16 %v29
    %v56 = vunpack.c.h.b16 %v29
    %v57 = vunpack.c.l.b16 %v30
    %v58 = vunpack.c.h.b16 %v30
    %v59 = vunpack.c.l.b16 %v31
    %v60 = vunpack.c.h.b16 %v31
    %v61 = vpack.c.b16 %v47, %v45
    %v62 = vpack.c.b16 %v48, %v46
    %v63 = vpack.c.b16 %v51, %v49
    %v64 = vpack.c.b16 %v52, %v50
    %v65 = vpack.c.b16 %v55, %v53
    %v66 = vpack.c.b16 %v56, %v54
    %v67 = vpack.c.b16 %v59, %v57
    %v68 = vpack.c.b16 %v60, %v58
    %vm77 = vcmask 523264
    %v79 = vsel %vm77, %v36, 0
    %81 = vmatprep.subr.bf16.mxu0 0
    %82 = vmatpush1.bf16.msra.mxu0 0
    %83 = vmatprep.subr.bf16.mxu0 0
    %84 = vmatpush1.bf16.msra.mxu0 0
    %85 = vmatprep.subr.bf16.mxu0 0
    %86 = vmatpush1.bf16.msra.mxu0 0
    %87 = vmatprep.subr.bf16.mxu0 0
    %88 = vmatpush1.bf16.msra.mxu0 0
    %89 = vmatprep.subr.bf16.mxu0 %v68
    %90 = vmatpush1.bf16.msra.mxu0 %v67
    %91 = vmatprep.subr.bf16.mxu0 %v66
    %92 = vmatpush1.bf16.msra.mxu0 %v65
    %93 = vmatprep.subr.bf16.mxu0 %v64
    %94 = vmatpush1.bf16.msra.mxu0 %v63
    %95 = vmatprep.subr.bf16.mxu0 %v62
    %96 = vmatpush1.bf16.msra.mxu0 %v61
    %97 = vmatprep.subr.bf16.mxu0 0
    %98 = vmatpush2.bf16.msra.mxu0 0
    %99 = vmatprep.subr.bf16.mxu0 0
    %100 = vmatpush2.bf16.msra.mxu0 0
    %101 = vmatprep.subr.bf16.mxu0 0
    %102 = vmatpush2.bf16.msra.mxu0 0
    %103 = vmatprep.subr.bf16.mxu0 0
    %104 = vmatpush2.bf16.msra.mxu0 0
    %105 = vmatprep.subr.bf16.mxu0 0
    %106 = vmatpush2.bf16.msra.mxu0 0
    %107 = vmatprep.subr.bf16.mxu0 0
    %108 = vmatpush2.bf16.msra.mxu0 0
    %109 = vmatprep.subr.bf16.mxu0 0
    %110 = vmatpush2.bf16.msra.mxu0 0
    %111 = vmatprep.subr.bf16.mxu0 0
    %112 = vmatpush2.bf16.msra.mxu0 0
    %113 = vmatprep.mubr.bf16.mxu0 0
    %114 = vmatmul.mubr.bf16.gmra.mxu0 %v79
    %v115 = vpop.f32.mrf.mxu0
    %v116 = vadd.f32 0.0, %v115
    %v117 = vpop.f32.mrf.mxu0
    %v118 = vadd.f32 0.0, %v117
    %v119 = vpop.f32.mrf.mxu0
    %v120 = vadd.f32 0.0, %v119
    %v121 = vpop.f32.mrf.mxu0
    %v122 = vadd.f32 0.0, %v121
    %123 = vdwg.mxu0
    %v124 = vpack.c.bf16 %v120, %v116
    %v125 = vpack.c.bf16 %v122, %v118
    %v126 = vld [vmem:[%s2] sm:$0xf]
    %v127 = vld [vmem:[%s2 + $0x4] sm:$0xf]
    %v128 = vld [vmem:[%s2 + $0x8] sm:$0xf]
    %v129 = vld [vmem:[%s2 + $0xc] sm:$0xf]
    %v130 = vld [vmem:[%s2 + $0x10] sm:$0xf]
    %v131 = vld [vmem:[%s2 + $0x14] sm:$0xf]
    %v132 = vld [vmem:[%s2 + $0x18] sm:$0xf]
    %v133 = vld [vmem:[%s2 + $0x1c] sm:$0xf]
    %v134 = vld [vmem:[%s2 + $0x20] sm:$0xf]
    %v135 = vld [vmem:[%s2 + $0x24] sm:$0xf]
    %v136 = vld [vmem:[%s2 + $0x28] sm:$0xf]
    %v137 = vld [vmem:[%s2 + $0x2c] sm:$0xf]
    %v138 = vld [vmem:[%s2 + $0x30] sm:$0xf]
    %v139 = vld [vmem:[%s2 + $0x34] sm:$0xf]
    %v140 = vld [vmem:[%s2 + $0x38] sm:$0xf]
    %v141 = vld [vmem:[%s2 + $0x3c] sm:$0xf]
    %v142 = vld [vmem:[%s2 + $0x40] sm:$0xf]
    %v143 = vld [vmem:[%s2 + $0x44] sm:$0xf]
    %v144 = vld [vmem:[%s2 + $0x48] sm:$0xf]
    %v145 = vld [vmem:[%s2 + $0x4c] sm:$0xf]
    %v146 = vld [vmem:[%s2 + $0x50] sm:$0xf]
    %v147 = vld [vmem:[%s2 + $0x54] sm:$0xf]
    %v148 = vld [vmem:[%s2 + $0x58] sm:$0xf]
    %v149 = vld [vmem:[%s2 + $0x5c] sm:$0xf]
    %v150 = vld [vmem:[%s2 + $0x60] sm:$0xf]
    %v151 = vld [vmem:[%s2 + $0x64] sm:$0xf]
    %v152 = vld [vmem:[%s2 + $0x68] sm:$0xf]
    %v153 = vld [vmem:[%s2 + $0x6c] sm:$0xf]
    %v154 = vld [vmem:[%s2 + $0x70] sm:$0xf]
    %v155 = vld [vmem:[%s2 + $0x74] sm:$0xf]
    %v156 = vld [vmem:[%s2 + $0x78] sm:$0xf]
    %v157 = vld [vmem:[%s2 + $0x7c] sm:$0xf]
    %v158 = vld [vmem:[%s3] sm:$0x7]
    %v159 = vlaneseq
    %v160 = vshrl.u32 %v159, 7
    %v161 = vsub.s32 0, %v160
    %v162 = vrot.slane %v158, %v161
    %v195 = vunpack.c.l.b16 %v126
    %v196 = vunpack.c.l.b16 %v127
    %v197 = vunpack.c.l.b16 %v128
    %v198 = vunpack.c.l.b16 %v129
    %v199 = vunpack.c.l.b16 %v130
    %v200 = vunpack.c.l.b16 %v131
    %v201 = vunpack.c.l.b16 %v132
    %v202 = vunpack.c.l.b16 %v133
    %v203 = vunpack.c.l.b16 %v134
    %v204 = vunpack.c.l.b16 %v135
    %v205 = vunpack.c.l.b16 %v136
    %v206 = vunpack.c.l.b16 %v137
    %v207 = vunpack.c.l.b16 %v138
    %v208 = vunpack.c.l.b16 %v139
    %v209 = vunpack.c.l.b16 %v140
    %v210 = vunpack.c.l.b16 %v141
    %v211 = vunpack.c.l.b16 %v142
    %v212 = vunpack.c.l.b16 %v143
    %v213 = vunpack.c.l.b16 %v144
    %v214 = vunpack.c.l.b16 %v145
    %v215 = vunpack.c.l.b16 %v146
    %v216 = vunpack.c.l.b16 %v147
    %v217 = vunpack.c.l.b16 %v148
    %v218 = vunpack.c.l.b16 %v149
    %v219 = vunpack.c.l.b16 %v150
    %v220 = vunpack.c.l.b16 %v151
    %v221 = vunpack.c.l.b16 %v152
    %v222 = vunpack.c.l.b16 %v153
    %v223 = vunpack.c.l.b16 %v154
    %v224 = vunpack.c.l.b16 %v155
    %v225 = vunpack.c.l.b16 %v156
    %v226 = vunpack.c.l.b16 %v157
    %v227 = vpack.c.b16 %v196, %v195
    %v228 = vpack.c.b16 %v198, %v197
    %v229 = vpack.c.b16 %v200, %v199
    %v230 = vpack.c.b16 %v202, %v201
    %v231 = vpack.c.b16 %v204, %v203
    %v232 = vpack.c.b16 %v206, %v205
    %v233 = vpack.c.b16 %v208, %v207
    %v234 = vpack.c.b16 %v210, %v209
    %v235 = vpack.c.b16 %v212, %v211
    %v236 = vpack.c.b16 %v214, %v213
    %v237 = vpack.c.b16 %v216, %v215
    %v238 = vpack.c.b16 %v218, %v217
    %v239 = vpack.c.b16 %v220, %v219
    %v240 = vpack.c.b16 %v222, %v221
    %v241 = vpack.c.b16 %v224, %v223
    %v242 = vpack.c.b16 %v226, %v225
    %259 = vmatprep.subr.bf16.mxu0 0
    %260 = vmatpush1.bf16.msra.mxu0 %v234
    %261 = vmatprep.subr.bf16.mxu0 0
    %262 = vmatpush1.bf16.msra.mxu0 %v233
    %263 = vmatprep.subr.bf16.mxu0 0
    %264 = vmatpush1.bf16.msra.mxu0 %v232
    %265 = vmatprep.subr.bf16.mxu0 0
    %266 = vmatpush1.bf16.msra.mxu0 %v231
    %267 = vmatprep.subr.bf16.mxu0 0
    %268 = vmatpush1.bf16.msra.mxu0 %v230
    %269 = vmatprep.subr.bf16.mxu0 0
    %270 = vmatpush1.bf16.msra.mxu0 %v229
    %271 = vmatprep.subr.bf16.mxu0 0
    %272 = vmatpush1.bf16.msra.mxu0 %v228
    %273 = vmatprep.subr.bf16.mxu0 0
    %274 = vmatpush1.bf16.msra.mxu0 %v227
    %275 = vmatprep.subr.bf16.mxu0 0
    %276 = vmatpush2.bf16.msra.mxu0 %v242
    %277 = vmatprep.subr.bf16.mxu0 0
    %278 = vmatpush2.bf16.msra.mxu0 %v241
    %279 = vmatprep.subr.bf16.mxu0 0
    %280 = vmatpush2.bf16.msra.mxu0 %v240
    %281 = vmatprep.subr.bf16.mxu0 0
    %282 = vmatpush2.bf16.msra.mxu0 %v239
    %283 = vmatprep.subr.bf16.mxu0 0
    %284 = vmatpush2.bf16.msra.mxu0 %v238
    %285 = vmatprep.subr.bf16.mxu0 0
    %286 = vmatpush2.bf16.msra.mxu0 %v237
    %287 = vmatprep.subr.bf16.mxu0 0
    %288 = vmatpush2.bf16.msra.mxu0 %v236
    %289 = vmatprep.subr.bf16.mxu0 0
    %290 = vmatpush2.bf16.msra.mxu0 %v235
    %291 = vmatprep.mubr.bf16.mxu0 %v125
    %292 = vmatmul.mubr.bf16.gmra.mxu0 %v124
    %v293 = vpop.f32.mrf.mxu0
    %v294 = vadd.f32 %v162, %v293
    %v295 = vpop.f32.mrf.mxu0
    %v296 = vpop.f32.mrf.mxu0
    %v297 = vadd.f32 %v162, %v296
    %v298 = vpop.f32.mrf.mxu0
    %299 = vdwg.mxu0
    %vm300 = vcmask 261120
    %v301 = vsel %vm300, %v294, 0.0
    %302 = vadd.xlane.f32.xlu0 %v301
    %v303 = vpop.xlane.xlu0 %302
    %v304 = vsel %vm300, %v297, 0.0
    %305 = vadd.xlane.f32.xlu0 %v304
    %v306 = vpop.xlane.xlu0 %305
    %v307 = vrcp.pop 32.0
    %v308 = vmul.f32 %v303, %v307
    %v309 = vmul.f32 %v306, %v307
    %v310 = vsub.f32 %v294, %v308
    %v311 = vsub.f32 %v297, %v309
    %v312 = vmul.f32 %v310, %v310
    %v313 = vmul.f32 %v311, %v311
    %v314 = vsel %vm300, %v312, 0.0
    %315 = vadd.xlane.f32.xlu0 %v314
    %v316 = vpop.xlane.xlu0 %315
    %v317 = vsel %vm300, %v313, 0.0
    %318 = vadd.xlane.f32.xlu0 %v317
    %v319 = vpop.xlane.xlu0 %318
    %v320 = vmul.f32 %v316, %v307
    %v321 = vmul.f32 %v319, %v307
    %v322 = vadd.f32 %v320, 1e-05
    %v323 = vadd.f32 %v321, 1e-05
    %v324 = vrsqrt.pop %v322
    %v325 = vrsqrt.pop %v323
    %v326 = vmul.f32 %v310, %v324
    %v327 = vmul.f32 %v311, %v325
    %v328 = vlaneseq
    %v329 = vshrl.u32 %v328, 7
    %v330 = vsub.s32 1, %v329
    %v331 = vrot.slane %v158, %v330
    %v332 = vmul.f32 %v326, %v331
    %v333 = vmul.f32 %v327, %v331
    %v334 = vlaneseq
    %v335 = vshrl.u32 %v334, 7
    %v336 = vsub.s32 2, %v335
    %v337 = vrot.slane %v158, %v336
    %v338 = vadd.f32 %v332, %v337
    %v339 = vadd.f32 %v333, %v337
    %v340 = vpack.c.bf16 %v339, %v338
    %v341 = vld [vmem:[%s4] sm:$0xf]
    %v342 = vld [vmem:[%s4 + $0x4] sm:$0xf]
    %v343 = vld [vmem:[%s4 + $0x8] sm:$0xf]
    %v344 = vld [vmem:[%s4 + $0xc] sm:$0xf]
    %v349 = vunpack.c.l.b16 %v341
    %v350 = vunpack.c.l.b16 %v342
    %v351 = vunpack.c.l.b16 %v343
    %v352 = vunpack.c.l.b16 %v344
    %v353 = vpack.c.b16 %v350, %v349
    %v354 = vpack.c.b16 %v352, %v351
    %v358 = vsel %vm300, %v340, 0
    %360 = vmatprep.subr.bf16.mxu0 0
    %361 = vmatpush1.bf16.msra.mxu0 0
    %362 = vmatprep.subr.bf16.mxu0 0
    %363 = vmatpush1.bf16.msra.mxu0 0
    %364 = vmatprep.subr.bf16.mxu0 0
    %365 = vmatpush1.bf16.msra.mxu0 0
    %366 = vmatprep.subr.bf16.mxu0 0
    %367 = vmatpush1.bf16.msra.mxu0 0
    %368 = vmatprep.subr.bf16.mxu0 0
    %369 = vmatpush1.bf16.msra.mxu0 0
    %370 = vmatprep.subr.bf16.mxu0 0
    %371 = vmatpush1.bf16.msra.mxu0 0
    %372 = vmatprep.subr.bf16.mxu0 0
    %373 = vmatpush1.bf16.msra.mxu0 %v354
    %374 = vmatprep.subr.bf16.mxu0 0
    %375 = vmatpush1.bf16.msra.mxu0 %v353
    %376 = vmatprep.subr.bf16.mxu0 0
    %377 = vmatpush2.bf16.msra.mxu0 0
    %378 = vmatprep.subr.bf16.mxu0 0
    %379 = vmatpush2.bf16.msra.mxu0 0
    %380 = vmatprep.subr.bf16.mxu0 0
    %381 = vmatpush2.bf16.msra.mxu0 0
    %382 = vmatprep.subr.bf16.mxu0 0
    %383 = vmatpush2.bf16.msra.mxu0 0
    %384 = vmatprep.subr.bf16.mxu0 0
    %385 = vmatpush2.bf16.msra.mxu0 0
    %386 = vmatprep.subr.bf16.mxu0 0
    %387 = vmatpush2.bf16.msra.mxu0 0
    %388 = vmatprep.subr.bf16.mxu0 0
    %389 = vmatpush2.bf16.msra.mxu0 0
    %390 = vmatprep.subr.bf16.mxu0 0
    %391 = vmatpush2.bf16.msra.mxu0 0
    %392 = vmatprep.mubr.bf16.mxu0 0
    %393 = vmatmul.mubr.bf16.gmra.mxu0 %v358
    %v394 = vpop.f32.mrf.mxu0
    %v395 = vadd.f32 0.0, %v394
    %v396 = vpop.f32.mrf.mxu0
    %v397 = vpop.f32.mrf.mxu0
    %v398 = vadd.f32 0.0, %v397
    %v399 = vpop.f32.mrf.mxu0
    %400 = vdwg.mxu0
    %401 = vst [vmem:[#allocation2] sm:$0xff] %v395
    %402 = vst [vmem:[#allocation2 + $0x8] sm:$0xff] %v398
    // Predicated region
    $region22: #{clip_model_wrapper_forward.1} parent=1 // pred_check
      _
    $region23: #{clip_model_wrapper_forward.1} parent=1 // pred_check_branch
      %404 = sbr.rel (0) target = $region25
    $region24: #{clip_model_wrapper_forward.1} parent=1 // pred_region
      %s406 = ssub.s32 256, 256
      %407 = vsyncadd [#allocation3], %s406
      %s408 = sshll.u32 [#allocation2], 4
      %s409 = int_to_ptr.vmem [resolvable:$true] %s408
      %414 = dma.vmem_to_hbm [thread:$0]  %s409, 256, %s5, [#allocation3], 128, 128, 8
    $region25: #{clip_model_wrapper_forward.1} parent=1 // pred_fallthru
      _
    // Predicated region
    $region26: #{clip_model_wrapper_forward.1} parent=1 // pred_check
      _
    $region27: #{clip_model_wrapper_forward.1} parent=1 // pred_check_branch
      %416 = sbr.rel (0) target = $region29
    $region28: #{clip_model_wrapper_forward.1} parent=1 // pred_region
      %417 = dma.done [#allocation3], 256
    $region29: #{clip_model_wrapper_forward.1} parent=1 // pred_fallthru
      _
    %418 = vsyncpa [#allocation3], 1

</llo_original>
